<compile_context>
chip_gen: v5e
topology: v5e:2x2
jax: 0.10.0
libtpu: 0.0.40
codegen_flags: <defaults>
</compile_context>

<pallas_src>
import functools

import jax
import jax.numpy as jnp
from jax.experimental import pallas as pl
from jax.experimental.pallas import tpu as pltpu


_LANE = 128
_VMEM_BUDGET = 40 * 1024 * 1024   # keep tiles comfortably inside v7x's 64 MiB
_VMEM_LIMIT = 48 * 1024 * 1024    # scoped-VMEM request (above v5e/v6e defaults)


def _cdiv(a, b):
    return -(-a // b)


def _round_up(x, m):
    return ((x + m - 1) // m) * m


def _balanced_tile(dim, tile_max, mult):
    """Largest tile <= tile_max that splits `dim` into balanced multiples."""
    tile_max = max(mult, min(tile_max, dim))
    n = _cdiv(dim, tile_max)
    return _round_up(_cdiv(dim, n), mult)


def _shrink(tile, dim, mult):
    """Shrink a tile by adding one more tile along `dim` (re-balanced)."""
    n = _cdiv(dim, tile) + 1
    new = _round_up(_cdiv(dim, n), mult)
    if new >= tile:
        new = max(mult, tile - mult)
    return new


# ---------------------------------------------------------------------------
# Kernels
# ---------------------------------------------------------------------------


def _indrnn_kernel_single_k(x_ref, w_ref, par_ref, h_ref, out_ref, *,
                            activation):
    # x_ref:   (tm, tk)   full reduction dim resident -> no accumulator needed
    # w_ref:   (tk, tn)   weight_ih.T tile (native MXU [M,K]x[K,N] orientation)
    # par_ref: (8, tn)    row 0 = bias_ih, row 1 = weight_hh (f32)
    # h_ref:   (tm, tn)   previous hidden state tile (original dtype)
    # out_ref: (tm, tn)
    acc = jnp.dot(x_ref[...], w_ref[...], preferred_element_type=jnp.float32)
    bias = par_ref[0:1, :]
    whh = par_ref[1:2, :]
    pre = acc + bias + whh * h_ref[...].astype(jnp.float32)
    out_ref[...] = activation(pre).astype(out_ref.dtype)


def _indrnn_kernel_multi_k(x_ref, w_ref, par_ref, h_ref, out_ref, acc_ref, *,
                           activation):
    # Same as above, but the reduction dim is tiled along grid axis 2 and
    # accumulated in an f32 VMEM scratch that persists across the K axis.
    k = pl.program_id(2)
    prod = jnp.dot(x_ref[...], w_ref[...], preferred_element_type=jnp.float32)

    @pl.when(k == 0)
    def _():
        acc_ref[...] = prod          # init with the first partial product

    @pl.when(k > 0)
    def _():
        acc_ref[...] += prod

    @pl.when(k == pl.num_programs(2) - 1)
    def _():
        bias = par_ref[0:1, :]
        whh = par_ref[1:2, :]
        pre = acc_ref[...] + bias + whh * h_ref[...].astype(jnp.float32)
        out_ref[...] = activation(pre).astype(out_ref.dtype)


# ---------------------------------------------------------------------------
# Wrapper
# ---------------------------------------------------------------------------


def make_indrnn_cell(weight_ih, weight_hh, bias_ih=None, *,
                     nonlinearity="relu", matmul_dtype=None, out_dtype=None,
                     tm_max=256, tn_max=2048, tk_max=1024):
    """Prepare padded parameters once and return step(x, hx) -> h'.

    weight_ih: (H, I), weight_hh: (H,), bias_ih: (H,) or None.
    x: (B, I), hx: (B, H); returns (B, H) in x.dtype (or out_dtype).
    """
    if nonlinearity == "relu":
        activation = lambda v: jnp.maximum(v, 0.0)
    elif nonlinearity == "tanh":
        activation = jnp.tanh
    else:
        raise RuntimeError("Unknown nonlinearity: {}".format(nonlinearity))

    H, I = weight_ih.shape
    mm_dtype = jnp.dtype(matmul_dtype) if matmul_dtype is not None \
        else jnp.dtype(weight_ih.dtype)
    mm_bytes = mm_dtype.itemsize
    # Packed-layout granularity: bf16 packs (16,128) tiles, 8-bit (32,128).
    sub = {4: 8, 2: 16, 1: 32}.get(mm_bytes, 8)
    lane_k = 128 if mm_bytes >= 4 else 256

    H_pad = _round_up(H, _LANE)
    I_pad = _round_up(I, lane_k)

    # ---- tile selection against the (v7x-safe) VMEM budget -----------------
    tn = _balanced_tile(H_pad, tn_max, _LANE)
    tk = _balanced_tile(I_pad, tk_max, lane_k)
    tm_cap = max(sub, _round_up(min(tm_max, 512), sub))

    def fits(tm_, tn_, tk_):
        buf = 2 * (tm_ * tk_ * mm_bytes      # x    (double buffered)
                   + tk_ * tn_ * mm_bytes    # w
                   + tm_ * tn_ * 4           # hx   (f32 worst case)
                   + tm_ * tn_ * 4           # out  (f32 worst case)
                   + 8 * tn_ * 4)            # bias/whh slab
        if tk_ < I_pad:
            buf += tm_ * tn_ * 4             # f32 accumulator scratch
        return buf <= _VMEM_BUDGET

    while not fits(tm_cap, tn, tk):
        if tk > lane_k:                       # shrink K first (cheapest)
            tk = _shrink(tk, I_pad, lane_k)
        elif tm_cap > sub:
            tm_cap = max(sub, _round_up(tm_cap // 2, sub))
        elif tn > _LANE:                      # shrink N last (adds re-reads)
            tn = _shrink(tn, H_pad, _LANE)
        else:
            break

    H_pad = _round_up(H_pad, tn)
    I_pad = _round_up(I_pad, tk)
    nk = I_pad // tk
    multi_k = nk > 1

    # ---- one-time parameter preparation (hoisted out of the step path) -----
    # weight_ih.T -> (I_pad, H_pad): MXU-native orientation; zero padding keeps
    # the math exact (padded K rows contribute 0, padded N cols give act(0)
    # and are sliced off).
    wp = jnp.pad(weight_ih.T.astype(mm_dtype),
                 ((0, I_pad - I), (0, H_pad - H)))
    par = jnp.zeros((8, H_pad), jnp.float32)
    if bias_ih is not None:
        par = par.at[0, :H].set(bias_ih.astype(jnp.float32))
    par = par.at[1, :H].set(weight_hh.astype(jnp.float32))

    def step(x, hx):
        B, I_in = x.shape
        if I_in != I:
            raise ValueError("input feature size mismatch")
        if hx.shape != (B, H):
            raise ValueError("hidden state shape mismatch")
        o_dtype = jnp.dtype(out_dtype) if out_dtype is not None else x.dtype

        B_pad = _round_up(B, sub)
        tm = _balanced_tile(B_pad, tm_cap, sub)
        B_pad = _round_up(B_pad, tm)

        tm_call, tn_call = tm, tn
        # Keep >= 2 programs on the parallel axes so v7x megacore isn't idle.
        if (B_pad // tm) * (H_pad // tn) == 1:
            if H_pad >= 2 * _LANE and (H_pad // 2) % _LANE == 0:
                tn_call = H_pad // 2
            elif B_pad >= 2 * sub and (B_pad // 2) % sub == 0:
                tm_call = B_pad // 2

        xp = x.astype(mm_dtype)
        if (B_pad, I_pad) != (B, I):
            xp = jnp.pad(xp, ((0, B_pad - B), (0, I_pad - I)))
        hp = hx                               # keep original dtype (no f32 cast)
        if (B_pad, H_pad) != (B, H):
            hp = jnp.pad(hp, ((0, B_pad - B), (0, H_pad - H)))

        nb = B_pad // tm_call
        nh = H_pad // tn_call

        if multi_k:
            grid = (nb, nh, nk)
            in_specs = [
                pl.BlockSpec((tm_call, tk), lambda i, j, k: (i, k)),   # x
                pl.BlockSpec((tk, tn_call), lambda i, j, k: (k, j)),   # w_ih.T
                pl.BlockSpec((8, tn_call), lambda i, j, k: (0, j)),    # bias/whh
                pl.BlockSpec((tm_call, tn_call), lambda i, j, k: (i, j)),  # hx
            ]
            out_spec = pl.BlockSpec((tm_call, tn_call), lambda i, j, k: (i, j))
            scratch = [pltpu.VMEM((tm_call, tn_call), jnp.float32)]
            kernel = functools.partial(_indrnn_kernel_multi_k,
                                       activation=activation)
            dims = ("parallel", "parallel", "arbitrary")
        else:
            grid = (nb, nh)
            in_specs = [
                pl.BlockSpec((tm_call, tk), lambda i, j: (i, 0)),
                pl.BlockSpec((tk, tn_call), lambda i, j: (0, j)),
                pl.BlockSpec((8, tn_call), lambda i, j: (0, j)),
                pl.BlockSpec((tm_call, tn_call), lambda i, j: (i, j)),
            ]
            out_spec = pl.BlockSpec((tm_call, tn_call), lambda i, j: (i, j))
            scratch = []
            kernel = functools.partial(_indrnn_kernel_single_k,
                                       activation=activation)
            dims = ("parallel", "parallel")

        out_padded = pl.pallas_call(
            kernel,
            out_shape=jax.ShapeDtypeStruct((B_pad, H_pad), o_dtype),
            grid_spec=pltpu.PrefetchScalarGridSpec(
                num_scalar_prefetch=0,
                grid=grid,
                in_specs=in_specs,
                out_specs=out_spec,
                scratch_shapes=scratch,
            ),
            compiler_params=pltpu.CompilerParams(
                dimension_semantics=dims,
                vmem_limit_bytes=_VMEM_LIMIT),
        )(xp, wp, par, hp)

        if (B_pad, H_pad) != (B, H):
            return out_padded[:B, :H]
        return out_padded

    return step


def indrnn_cell(x, hx, weight_ih, weight_hh, bias_ih=None, **kwargs):
    """One-shot convenience wrapper. For sequences, build the cell once via
    make_indrnn_cell so the padded weights are reused across timesteps."""
    return make_indrnn_cell(weight_ih, weight_hh, bias_ih, **kwargs)(x, hx)


def _check_bounds(w, min_abs, max_abs):
    # mirrors the PyTorch check_bounds helper (applied to weight_hh at init)
    if min_abs:
        w = jnp.sign(w) * jnp.clip(jnp.abs(w), min=min_abs)
    if max_abs:
        w = jnp.clip(w, -max_abs, max_abs)
    return w


if __name__ == "__main__":
    # ------------------------------------------------------------------
    # Test 1: docstring example shapes (IndRNNCell(10, 20), batch 3),
    # relu, driven for a short sequence with the weight prep hoisted.
    # ------------------------------------------------------------------
    batch, input_size, hidden_size = 3, 10, 20
    key = jax.random.PRNGKey(0)
    k_x, k_h, k_w = jax.random.split(key, 3)

    seq = jax.random.normal(k_x, (3, batch, input_size), dtype=jnp.float32)
    hx = jax.random.normal(k_h, (batch, hidden_size), dtype=jnp.float32)

    # reset_parameters(): weight_ih ~ N(0, 0.01), weight_hh = 1, bias_ih = 0,
    # then check_bounds(weight_hh, hidden_min_abs=0, hidden_max_abs=None).
    weight_ih = 0.01 * jax.random.normal(
        k_w, (hidden_size, input_size), dtype=jnp.float32)
    weight_hh = _check_bounds(jnp.ones((hidden_size,), jnp.float32), 0, None)
    bias_ih = jnp.zeros((hidden_size,), jnp.float32)

    cell = make_indrnn_cell(weight_ih, weight_hh, bias_ih, nonlinearity="relu")

    h = hx
    h_ref = hx
    for t in range(seq.shape[0]):       # padded weights reused across steps
        h = cell(seq[t], h)
        h_ref = jax.nn.relu(seq[t] @ weight_ih.T + bias_ih + weight_hh * h_ref)
    h = jax.block_until_ready(h)
    assert h.shape == (batch, hidden_size)
    assert jnp.allclose(h, h_ref, atol=1e-5, rtol=1e-5), (
        float(jnp.max(jnp.abs(h - h_ref))))

    # ------------------------------------------------------------------
    # Test 2: multi-K path (input dim larger than the K tile), tanh,
    # non-trivial bias and a bounded weight_hh.
    # ------------------------------------------------------------------
    batch2, input2, hidden2 = 5, 300, 40
    k1, k2, k3, k4, k5 = jax.random.split(jax.random.PRNGKey(1), 5)
    x2 = jax.random.normal(k1, (batch2, input2), dtype=jnp.float32)
    h2 = jax.random.normal(k2, (batch2, hidden2), dtype=jnp.float32)
    w_ih2 = 0.05 * jax.random.normal(k3, (hidden2, input2), dtype=jnp.float32)
    w_hh2 = _check_bounds(
        jax.random.normal(k4, (hidden2,), dtype=jnp.float32), 0.1, 1.0)
    b_ih2 = 0.1 * jax.random.normal(k5, (hidden2,), dtype=jnp.float32)

    cell2 = make_indrnn_cell(w_ih2, w_hh2, b_ih2, nonlinearity="tanh",
                             tk_max=128)   # force I_pad=384 -> 3 K steps
    out2 = jax.block_until_ready(cell2(x2, h2))
    ref2 = jnp.tanh(x2 @ w_ih2.T + b_ih2 + w_hh2 * h2)
    assert out2.shape == (batch2, hidden2)
    assert jnp.allclose(out2, ref2, atol=5e-5, rtol=5e-5), (
        float(jnp.max(jnp.abs(out2 - ref2))))

    print("KERNEL_OK")
</pallas_src>

<mosaic_0001>
module attributes {stable_mosaic.version = 11 : i64} {
  func.func @_indrnn_kernel_single_k(%arg0: i32, %arg1: i32, %arg2: memref<8x128xf32, #tpu.memory_space<vmem>>, %arg3: memref<128x128xf32, #tpu.memory_space<vmem>>, %arg4: memref<8x128xf32, #tpu.memory_space<vmem>>, %arg5: memref<8x128xf32, #tpu.memory_space<vmem>>, %arg6: memref<8x128xf32, #tpu.memory_space<vmem>>) attributes {dimension_semantics = [#tpu.dimension_semantics<parallel>, #tpu.dimension_semantics<parallel>], iteration_bounds = array<i64: 1, 1>, scalar_prefetch = 0 : i64, scratch_operands = 0 : i64, tpu.core_type = #tpu.core_type<tc>, window_params = [{transform_indices = @transform_0, window_bounds = array<i64: 8, 128>}, {transform_indices = @transform_1, window_bounds = array<i64: 128, 128>}, {transform_indices = @transform_2, window_bounds = array<i64: 8, 128>}, {transform_indices = @transform_3, window_bounds = array<i64: 8, 128>}, {transform_indices = @transform_4, window_bounds = array<i64: 8, 128>}]} {
    %c0 = arith.constant 0 : index
    %c0_0 = arith.constant 0 : index
    %0 = vector.load %arg2[%c0, %c0_0] : memref<8x128xf32, #tpu.memory_space<vmem>>, vector<8x128xf32>
    %c0_1 = arith.constant 0 : index
    %c0_2 = arith.constant 0 : index
    %1 = vector.load %arg3[%c0_1, %c0_2] : memref<128x128xf32, #tpu.memory_space<vmem>>, vector<128x128xf32>
    %cst = arith.constant dense<0.000000e+00> : vector<8x128xf32>
    %2 = tpu.matmul %0, %1, %cst {dimension_numbers = #tpu.dot_dimension_numbers<[1], [0], [0], [1], [0, 0, 1, 1], [], []>} : vector<8x128xf32>, vector<128x128xf32>, vector<8x128xf32> -> vector<8x128xf32>
    %c0_3 = arith.constant 0 : index
    %c0_4 = arith.constant 0 : index
    %3 = vector.load %arg4[%c0_3, %c0_4] : memref<8x128xf32, #tpu.memory_space<vmem>>, vector<1x128xf32>
    %c1 = arith.constant 1 : index
    %c0_5 = arith.constant 0 : index
    %4 = vector.load %arg4[%c1, %c0_5] : memref<8x128xf32, #tpu.memory_space<vmem>>, vector<1x128xf32>
    %5 = vector.broadcast %3 : vector<1x128xf32> to vector<8x128xf32>
    %6 = arith.addf %2, %5 : vector<8x128xf32>
    %c0_6 = arith.constant 0 : index
    %c0_7 = arith.constant 0 : index
    %7 = vector.load %arg5[%c0_6, %c0_7] : memref<8x128xf32, #tpu.memory_space<vmem>>, vector<8x128xf32>
    %8 = vector.broadcast %4 : vector<1x128xf32> to vector<8x128xf32>
    %9 = arith.mulf %8, %7 : vector<8x128xf32>
    %10 = arith.addf %6, %9 : vector<8x128xf32>
    %cst_8 = arith.constant 0.000000e+00 : f32
    %11 = vector.broadcast %cst_8 : f32 to vector<8x128xf32>
    %12 = arith.maximumf %10, %11 : vector<8x128xf32>
    %c0_9 = arith.constant 0 : index
    %c0_10 = arith.constant 0 : index
    %13 = vector.load %arg6[%c0_9, %c0_10] : memref<8x128xf32, #tpu.memory_space<vmem>>, vector<8x128xf32>
    tpu.vector_store %arg6[%c0_9, %c0_10], %12 {strides = array<i32>} : memref<8x128xf32, #tpu.memory_space<vmem>>, vector<8x128xf32>,
    return
  }
  func.func @transform_0(%arg0: i32, %arg1: i32) -> (i32, i32) {
    %c0_i32 = arith.constant 0 : i32
    %c0_i32_0 = arith.constant 0 : i32
    return %arg0, %c0_i32 : i32, i32
  }
  func.func @transform_1(%arg0: i32, %arg1: i32) -> (i32, i32) {
    %c0_i32 = arith.constant 0 : i32
    %c0_i32_0 = arith.constant 0 : i32
    return %c0_i32, %arg1 : i32, i32
  }
  func.func @transform_2(%arg0: i32, %arg1: i32) -> (i32, i32) {
    %c0_i32 = arith.constant 0 : i32
    %c0_i32_0 = arith.constant 0 : i32
    return %c0_i32, %arg1 : i32, i32
  }
  func.func @transform_3(%arg0: i32, %arg1: i32) -> (i32, i32) {
    %c0_i32 = arith.constant 0 : i32
    return %arg0, %arg1 : i32, i32
  }
  func.func @transform_4(%arg0: i32, %arg1: i32) -> (i32, i32) {
    %c0_i32 = arith.constant 0 : i32
    return %arg0, %arg1 : i32, i32
  }
}

</mosaic_0001>

<llo_original>
// kernel: tpu_custom_call.1
$region0: #{tpu_custom_call.1}
  #allocation0 [shape = 'u32[]', space=smem, size = 0x4, offset = 0x4, fixed_abs, tag = 'smem constant byte address 0x4 - core index']
  #allocation1 [shape = 'u32[72,128]{1,0:T(1,128)}', space=vmem, size = 0x9000, scoped, tag = 'internal scratch']
  %s0 = inlined_call_operand.hbm [shape: f32[8,128], index: 0, kind: input, shape index: {}]
  %s1 = inlined_call_operand.hbm [shape: f32[128,128], index: 1, kind: input, shape index: {}]
  %s2 = inlined_call_operand.hbm [shape: f32[8,128], index: 2, kind: input, shape index: {}]
  %s3 = inlined_call_operand.hbm [shape: f32[8,128], index: 3, kind: input, shape index: {}]
  %s4 = inlined_call_operand.hbm [shape: f32[8,128], index: 4, kind: output, shape index: {}]
  %s5 = sld [smem:[#allocation0]]
  $region42: #{tpu_custom_call.1} parent=0
    _
  %s7 = ssub.s32 1, %s5
  %s8 = scalar_select 0, %s7, %s5
  $region1: #{tpu_custom_call.1} parent=0
    #allocation2 [shape = 'u8[4096]{0}', space=vmem, size = 0x1000, scoped, tag = 'input window, operand 0, single buffered']
    #allocation3 [shape = 's32[1]{0}', space=sflag, size = 0x4, scoped, tag = 'scoped memory for tpu_custom_call.1']
    #allocation4 [shape = 's32[1]{0}', space=sflag, size = 0x4, scoped, tag = 'scoped memory for tpu_custom_call.1']
    #allocation5 [shape = 'u8[65536]{0}', space=vmem, size = 0x10000, scoped, tag = 'input window, operand 1, single buffered']
    #allocation6 [shape = 's32[1]{0}', space=sflag, size = 0x4, scoped, tag = 'scoped memory for tpu_custom_call.1']
    #allocation7 [shape = 'u8[4096]{0}', space=vmem, size = 0x1000, scoped, tag = 'input window, operand 2, single buffered']
    #allocation8 [shape = 'u8[4096]{0}', space=vmem, size = 0x1000, scoped, tag = 'input window, operand 3, single buffered']
    #allocation9 [shape = 's32[1]{0}', space=sflag, size = 0x4, scoped, tag = 'scoped memory for tpu_custom_call.1']
    #allocation10 [shape = 'u8[4096]{0}', space=vmem, size = 0x1000, scoped, tag = 'output window, operand 0, single buffered']
    %9 = vsyncpa [#allocation3], 0
    %10 = vsyncpa [#allocation6], 0
    %11 = vsyncpa [#allocation9], 0
    %12 = vsyncpa [#allocation4], 0
    // Predicated region
    $region2: #{tpu_custom_call.1} parent=1 // pred_check
      _
    $region3: #{tpu_custom_call.1} parent=1 // pred_check_branch
      %14 = sbr.rel (0) target = $region5
    $region4: #{tpu_custom_call.1} parent=1 // pred_region
      %16 = vsyncadd [#allocation3], 0
      %s18 = sshll.u32 %s0, 4
      %s19 = int_to_ptr.hbm [resolvable:$true] %s18
      %s20 = sshll.u32 [#allocation2], 4
      %s21 = int_to_ptr.vmem [resolvable:$true] %s20
      %23 = dma.hbm_to_vmem [thread:$0]  %s19, 128, %s21, [#allocation3]
    $region5: #{tpu_custom_call.1} parent=1 // pred_fallthru
      _
    // Predicated region
    $region6: #{tpu_custom_call.1} parent=1 // pred_check
      _
    $region7: #{tpu_custom_call.1} parent=1 // pred_check_branch
      %25 = sbr.rel (0) target = $region9
    $region8: #{tpu_custom_call.1} parent=1 // pred_region
      %27 = vsyncadd [#allocation6], 0
      %s28 = sshll.u32 %s1, 4
      %s29 = int_to_ptr.hbm [resolvable:$true] %s28
      %s30 = sshll.u32 [#allocation5], 4
      %s31 = int_to_ptr.vmem [resolvable:$true] %s30
      %36 = dma.hbm_to_vmem [thread:$0]  %s29, 2048, %s31, [#allocation6], 128, 128, 8
    $region9: #{tpu_custom_call.1} parent=1 // pred_fallthru
      _
    // Predicated region
    $region10: #{tpu_custom_call.1} parent=1 // pred_check
      _
    $region11: #{tpu_custom_call.1} parent=1 // pred_check_branch
      %38 = sbr.rel (0) target = $region13
    $region12: #{tpu_custom_call.1} parent=1 // pred_region
      %40 = vsyncadd [#allocation6], 0
      %s42 = sshll.u32 %s2, 4
      %s43 = int_to_ptr.hbm [resolvable:$true] %s42
      %s44 = sshll.u32 [#allocation7], 4
      %s45 = int_to_ptr.vmem [resolvable:$true] %s44
      %47 = dma.hbm_to_vmem [thread:$0]  %s43, 128, %s45, [#allocation6]
    $region13: #{tpu_custom_call.1} parent=1 // pred_fallthru
      _
    // Predicated region
    $region14: #{tpu_custom_call.1} parent=1 // pred_check
      _
    $region15: #{tpu_custom_call.1} parent=1 // pred_check_branch
      %49 = sbr.rel (0) target = $region17
    $region16: #{tpu_custom_call.1} parent=1 // pred_region
      %51 = vsyncadd [#allocation9], 0
      %s53 = sshll.u32 %s3, 4
      %s54 = int_to_ptr.hbm [resolvable:$true] %s53
      %s55 = sshll.u32 [#allocation8], 4
      %s56 = int_to_ptr.vmem [resolvable:$true] %s55
      %58 = dma.hbm_to_vmem [thread:$0]  %s54, 128, %s56, [#allocation9]
    $region17: #{tpu_custom_call.1} parent=1 // pred_fallthru
      _
    // Predicated region
    $region18: #{tpu_custom_call.1} parent=1 // pred_check
      _
    $region19: #{tpu_custom_call.1} parent=1 // pred_check_branch
      %60 = sbr.rel (0) target = $region21
    $region20: #{tpu_custom_call.1} parent=1 // pred_region
      %62 = dma.done [#allocation3], 128
    $region21: #{tpu_custom_call.1} parent=1 // pred_fallthru
      _
    // Predicated region
    $region22: #{tpu_custom_call.1} parent=1 // pred_check
      _
    $region23: #{tpu_custom_call.1} parent=1 // pred_check_branch
      %64 = sbr.rel (0) target = $region25
    $region24: #{tpu_custom_call.1} parent=1 // pred_region
      %66 = dma.done [#allocation6], 2048
    $region25: #{tpu_custom_call.1} parent=1 // pred_fallthru
      _
    // Predicated region
    $region26: #{tpu_custom_call.1} parent=1 // pred_check
      _
    $region27: #{tpu_custom_call.1} parent=1 // pred_check_branch
      %68 = sbr.rel (0) target = $region29
    $region28: #{tpu_custom_call.1} parent=1 // pred_region
      %70 = dma.done [#allocation6], 128
    $region29: #{tpu_custom_call.1} parent=1 // pred_fallthru
      _
    // Predicated region
    $region30: #{tpu_custom_call.1} parent=1 // pred_check
      _
    $region31: #{tpu_custom_call.1} parent=1 // pred_check_branch
      %72 = sbr.rel (0) target = $region33
    $region32: #{tpu_custom_call.1} parent=1 // pred_region
      %74 = dma.done [#allocation9], 128
    $region33: #{tpu_custom_call.1} parent=1 // pred_fallthru
      _
    %v75 = vld [vmem:[#allocation2] sm:$0xff]
    %v76 = vld [vmem:[#allocation5] sm:$0xff]
    %v77 = vld [vmem:[#allocation5 + $0x8] sm:$0xff]
    %v78 = vld [vmem:[#allocation5 + $0x10] sm:$0xff]
    %v79 = vld [vmem:[#allocation5 + $0x18] sm:$0xff]
    %v80 = vld [vmem:[#allocation5 + $0x20] sm:$0xff]
    %v81 = vld [vmem:[#allocation5 + $0x28] sm:$0xff]
    %v82 = vld [vmem:[#allocation5 + $0x30] sm:$0xff]
    %v83 = vld [vmem:[#allocation5 + $0x38] sm:$0xff]
    %v84 = vld [vmem:[#allocation5 + $0x40] sm:$0xff]
    %v85 = vld [vmem:[#allocation5 + $0x48] sm:$0xff]
    %v86 = vld [vmem:[#allocation5 + $0x50] sm:$0xff]
    %v87 = vld [vmem:[#allocation5 + $0x58] sm:$0xff]
    %v88 = vld [vmem:[#allocation5 + $0x60] sm:$0xff]
    %v89 = vld [vmem:[#allocation5 + $0x68] sm:$0xff]
    %v90 = vld [vmem:[#allocation5 + $0x70] sm:$0xff]
    %v91 = vld [vmem:[#allocation5 + $0x78] sm:$0xff]
    %v92 = vld [vmem:[#allocation7] sm:$0x1]
    %v93 = vld [vmem:[#allocation7 + $0x1] sm:$0x1]
    %v94 = vperm.slane %v92, 0
    %95 = vmatpush.msra.mxu0 %v91
    %96 = vmatpush.msra.mxu0 %v90
    %97 = vmatpush.msra.mxu0 %v89
    %98 = vmatpush.msra.mxu0 %v88
    %99 = vmatpush.msra.mxu0 %v87
    %100 = vmatpush.msra.mxu0 %v86
    %101 = vmatpush.msra.mxu0 %v85
    %102 = vmatpush.msra.mxu0 %v84
    %103 = vmatpush.msra.mxu0 %v83
    %104 = vmatpush.msra.mxu0 %v82
    %105 = vmatpush.msra.mxu0 %v81
    %106 = vmatpush.msra.mxu0 %v80
    %107 = vmatpush.msra.mxu0 %v79
    %108 = vmatpush.msra.mxu0 %v78
    %109 = vmatpush.msra.mxu0 %v77
    %110 = vmatpush.msra.mxu0 %v76
    %111 = vmatmul.f32.gmra.mxu0 %v75
    %v112 = vpop.f32.mrf.mxu0
    %v113 = vadd.f32 %v94, %v112
    %114 = vdwg.mxu0
    %v115 = vld [vmem:[#allocation8] sm:$0xff]
    %v116 = vperm.slane %v93, 0
    %v117 = vmul.f32 %v116, %v115
    %v118 = vadd.f32 %v113, %v117
    %v119 = vmax.f32 %v118, 0.0
    %120 = vst [vmem:[#allocation10] sm:$0xff] %v119
    // Predicated region
    $region34: #{tpu_custom_call.1} parent=1 // pred_check
      _
    $region35: #{tpu_custom_call.1} parent=1 // pred_check_branch
      %122 = sbr.rel (0) target = $region37
    $region36: #{tpu_custom_call.1} parent=1 // pred_region
      %124 = vsyncadd [#allocation4], 0
      %s126 = sshll.u32 [#allocation10], 4
      %s127 = int_to_ptr.vmem [resolvable:$true] %s126
      %s128 = sshll.u32 %s4, 4
      %s129 = int_to_ptr.hbm [resolvable:$true] %s128
      %131 = dma.vmem_to_hbm [thread:$0]  %s127, 128, %s129, [#allocation4]
    $region37: #{tpu_custom_call.1} parent=1 // pred_fallthru
      _
    // Predicated region
    $region38: #{tpu_custom_call.1} parent=1 // pred_check
      _
    $region39: #{tpu_custom_call.1} parent=1 // pred_check_branch
      %133 = sbr.rel (0) target = $region41
    $region40: #{tpu_custom_call.1} parent=1 // pred_region
      %135 = dma.done [#allocation4], 128
    $region41: #{tpu_custom_call.1} parent=1 // pred_fallthru
      _
    %136 = vsyncpa [#allocation3], 1
    %137 = vsyncpa [#allocation6], 1
    %138 = vsyncpa [#allocation9], 1
    %139 = vsyncpa [#allocation4], 1

</llo_original>
